<compile_context>
chip_gen: v7x
topology: tpu7x:2x2x1
jax: 0.10.0
libtpu: 0.0.40
codegen_flags: <defaults>
</compile_context>

<pallas_src>
import math
import numpy as np
import jax
import jax.numpy as jnp
from jax.experimental import pallas as pl
from jax.experimental.pallas import tpu as pltpu


# ---------------------------------------------------------------------------
# Parameter glue: merged weight W = concat_s( UhT[s] @ LgT[s] )[:, :out_size].
#   UhT[s][m, r*n+i] = H[s, r, m-i] if m >= i else 0
#   LgT[s][r*n+j, k] = G[s, r, k-j] if k >= j else 0
# Batch-independent; in a training setup this should live under jit / be cached
# per parameter update rather than rebuilt per forward.
# ---------------------------------------------------------------------------
def _merged_weight(G, H, out_size):
    nstack, rank, n = G.shape
    rows = jnp.arange(n)[:, None]
    cols = jnp.arange(n)[None, :]

    diff = rows - cols                                                    # m - i
    uh = jnp.where(diff >= 0, H[..., jnp.clip(diff, 0, n - 1)], 0.0)      # (ns,r,m,i)
    diff2 = cols - rows                                                   # k - j
    lg = jnp.where(diff2 >= 0, G[..., jnp.clip(diff2, 0, n - 1)], 0.0)    # (ns,r,j,k)

    W = jnp.einsum("srmi,srik->smk", uh, lg,
                   precision=jax.lax.Precision.HIGHEST)                   # (ns,n,n)
    W = jnp.transpose(W, (1, 0, 2)).reshape(n, nstack * n)[:, :out_size]  # (n,out)
    return W


# ---------------------------------------------------------------------------
# Pallas kernel: one batch-tile GEMM with fused bias.
#   x_ref: (TM, n) f32   w_ref: (n, out_size) bf16   b_ref: (1, out_size) f32
#   y_ref: (TM, out_size) f32
# ---------------------------------------------------------------------------
def _toeplitzlike_kernel(x_ref, w_ref, b_ref, y_ref):
    x = x_ref[...].astype(jnp.bfloat16)          # in-kernel cast: x DMA'd once as f32
    y = jnp.dot(x, w_ref[...], preferred_element_type=jnp.float32)
    y_ref[...] = y + b_ref[...]                  # bias add = free VPU filler


def toeplitzlike_linear(x, G, H, bias, out_size):
    """x: (..., in_size) -> (..., out_size). Matches ToeplitzlikeLinear.forward."""
    nstack, rank, n = G.shape
    assert x.shape[-1] == n
    lead = x.shape[:-1]
    bflat = int(np.prod(lead))
    u = x.reshape(bflat, n).astype(jnp.float32)

    W = _merged_weight(G.astype(jnp.float32), H.astype(jnp.float32), out_size)
    w_bf16 = W.astype(jnp.bfloat16)
    b_row = bias if bias is not None else jnp.zeros((out_size,), jnp.float32)
    b_row = b_row.astype(jnp.float32).reshape(1, out_size)

    # Batch tiling: sublane-aligned TM, sweep-friendly default 512 for big batches.
    TM = 512
    if bflat <= TM:
        TM = -(-bflat // 8) * 8                  # single tile, rounded up to 8
    bflat_pad = -(-bflat // TM) * TM
    if bflat_pad != bflat:
        u = jnp.pad(u, ((0, bflat_pad - bflat), (0, 0)))

    cost = pl.CostEstimate(
        flops=2 * bflat_pad * n * out_size,
        transcendentals=0,
        bytes_accessed=(u.size * 4 + w_bf16.size * 2 + b_row.size * 4
                        + bflat_pad * out_size * 4),
    )

    y = pl.pallas_call(
        _toeplitzlike_kernel,
        out_shape=jax.ShapeDtypeStruct((bflat_pad, out_size), jnp.float32),
        grid=(bflat_pad // TM,),
        in_specs=[
            pl.BlockSpec((TM, n), lambda i: (i, 0)),
            pl.BlockSpec((n, out_size), lambda i: (0, 0)),   # weight resident
            pl.BlockSpec((1, out_size), lambda i: (0, 0)),   # bias resident
        ],
        out_specs=pl.BlockSpec((TM, out_size), lambda i: (i, 0)),
        compiler_params=pltpu.CompilerParams(dimension_semantics=("parallel",)),
        cost_estimate=cost,
    )(u, w_bf16, b_row)

    out = y[:bflat]
    return out.reshape(*lead, out_size)


# ---------------------------------------------------------------------------
# Pure-JAX FFT reference mirroring the torch.rfft/irfft forward (for checking).
# ---------------------------------------------------------------------------
def _reference_fft(x, G, H, bias, out_size):
    n = x.shape[-1]
    bflat = int(np.prod(x.shape[:-1]))
    u = x.reshape(bflat, n)
    rev = jnp.arange(n - 1, -1, -1)

    u_f = jnp.fft.rfft(jnp.concatenate([u[:, rev], jnp.zeros_like(u)], -1), axis=-1)
    h_f = jnp.fft.rfft(jnp.concatenate([H, jnp.zeros_like(H)], -1), axis=-1)
    uv_f = u_f[:, None, None, :] * h_f[None]
    transpose_out = jnp.fft.irfft(uv_f, n=2 * n, axis=-1)[..., rev]       # (B,ns,r,n)

    w_f = jnp.fft.rfft(jnp.concatenate([transpose_out,
                                        jnp.zeros_like(transpose_out)], -1), axis=-1)
    g_f = jnp.fft.rfft(jnp.concatenate([G, jnp.zeros_like(G)], -1), axis=-1)
    wv_sum_f = (w_f * g_f[None]).sum(axis=2)                               # (B,ns,n+1)
    out = jnp.fft.irfft(wv_sum_f, n=2 * n, axis=-1)[..., :n]               # (B,ns,n)

    out = out.reshape(bflat, -1)[:, :out_size]
    if bias is not None:
        out = out + bias
    return out.reshape(*x.shape[:-1], out_size)


if __name__ == "__main__":
    in_size, out_size, rank = 16, 24, 4
    nstack = int(math.ceil(out_size / in_size))          # = 2

    key = jax.random.PRNGKey(0)
    kG, kH, kb, kx = jax.random.split(key, 4)

    init_stddev = math.sqrt(1.0 / (rank * in_size))
    G = jax.random.normal(kG, (nstack, rank, in_size), jnp.float32) * init_stddev
    H = jax.random.normal(kH, (nstack, rank, in_size), jnp.float32) * init_stddev
    bound = 1.0 / math.sqrt(in_size)
    bias = jax.random.uniform(kb, (out_size,), jnp.float32, minval=-bound, maxval=bound)

    # channels-last input (B, H, W, in_size) == NCHW (2, 16, 4, 4).permute(0,2,3,1)
    x = jax.random.normal(kx, (2, 4, 4, in_size), jnp.float32)

    out = toeplitzlike_linear(x, G, H, bias, out_size)
    out = jax.block_until_ready(out)

    ref = _reference_fft(x, G, H, bias, out_size)
    assert out.shape == (2, 4, 4, out_size)
    err = float(np.max(np.abs(np.asarray(out) - np.asarray(ref))))
    # bf16 MXU inputs (per perf guidance) vs f32 FFT reference: tolerance absorbs it.
    assert np.allclose(np.asarray(out), np.asarray(ref), rtol=2e-2, atol=2e-2), err

    print("KERNEL_OK")
</pallas_src>

<mosaic_0001>
module attributes {stable_mosaic.version = 11 : i64} {
  func.func @_toeplitzlike_kernel(%arg0: i32, %arg1: memref<32x16xf32, #tpu.memory_space<vmem>>, %arg2: memref<16x24xbf16, #tpu.memory_space<vmem>>, %arg3: memref<1x24xf32, #tpu.memory_space<vmem>>, %arg4: memref<32x24xf32, #tpu.memory_space<vmem>>) attributes {dimension_semantics = [#tpu.dimension_semantics<parallel>], iteration_bounds = array<i64: 1>, scalar_prefetch = 0 : i64, scratch_operands = 0 : i64, tpu.core_type = #tpu.core_type<tc>, window_params = [{transform_indices = @transform_0, window_bounds = array<i64: 32, 16>}, {pipeline_mode = #tpu.pipeline_mode<synchronous>, transform_indices = @transform_1, window_bounds = array<i64: 16, 24>}, {pipeline_mode = #tpu.pipeline_mode<synchronous>, transform_indices = @transform_2, window_bounds = array<i64: 1, 24>}, {transform_indices = @transform_3, window_bounds = array<i64: 32, 24>}]} {
    %c0 = arith.constant 0 : index
    %c0_0 = arith.constant 0 : index
    %0 = vector.load %arg1[%c0, %c0_0] : memref<32x16xf32, #tpu.memory_space<vmem>>, vector<32x16xf32>
    %1 = arith.truncf %0 : vector<32x16xf32> to vector<32x16xbf16>
    %c0_1 = arith.constant 0 : index
    %c0_2 = arith.constant 0 : index
    %2 = vector.load %arg2[%c0_1, %c0_2] : memref<16x24xbf16, #tpu.memory_space<vmem>>, vector<16x24xbf16>
    %cst = arith.constant dense<0.000000e+00> : vector<32x24xf32>
    %3 = tpu.matmul %1, %2, %cst {dimension_numbers = #tpu.dot_dimension_numbers<[1], [0], [0], [1], [0, 0, 1, 1], [], []>} : vector<32x16xbf16>, vector<16x24xbf16>, vector<32x24xf32> -> vector<32x24xf32>
    %c0_3 = arith.constant 0 : index
    %c0_4 = arith.constant 0 : index
    %4 = vector.load %arg3[%c0_3, %c0_4] : memref<1x24xf32, #tpu.memory_space<vmem>>, vector<1x24xf32>
    %5 = vector.broadcast %4 : vector<1x24xf32> to vector<32x24xf32>
    %6 = arith.addf %3, %5 : vector<32x24xf32>
    %c0_5 = arith.constant 0 : index
    %c0_6 = arith.constant 0 : index
    %7 = vector.load %arg4[%c0_5, %c0_6] : memref<32x24xf32, #tpu.memory_space<vmem>>, vector<32x24xf32>
    tpu.vector_store %arg4[%c0_5, %c0_6], %6 {strides = array<i32>} : memref<32x24xf32, #tpu.memory_space<vmem>>, vector<32x24xf32>,
    return
  }
  func.func @transform_0(%arg0: i32) -> (i32, i32) {
    %c0_i32 = arith.constant 0 : i32
    %c0_i32_0 = arith.constant 0 : i32
    return %arg0, %c0_i32 : i32, i32
  }
  func.func @transform_1(%arg0: i32) -> (i32, i32) {
    %c0_i32 = arith.constant 0 : i32
    %c0_i32_0 = arith.constant 0 : i32
    %c0_i32_1 = arith.constant 0 : i32
    return %c0_i32, %c0_i32_0 : i32, i32
  }
  func.func @transform_2(%arg0: i32) -> (i32, i32) {
    %c0_i32 = arith.constant 0 : i32
    %c0_i32_0 = arith.constant 0 : i32
    %c0_i32_1 = arith.constant 0 : i32
    return %c0_i32, %c0_i32_0 : i32, i32
  }
  func.func @transform_3(%arg0: i32) -> (i32, i32) {
    %c0_i32 = arith.constant 0 : i32
    %c0_i32_0 = arith.constant 0 : i32
    return %arg0, %c0_i32 : i32, i32
  }
}

</mosaic_0001>

<llo_original>
// kernel: tpu_custom_call.1
$region0: #{tpu_custom_call.1}
  #allocation0 [shape = 'u32[]', space=smem, size = 0x4, offset = 0x4, fixed_abs, tag = 'smem constant byte address 0x4 - core index']
  #allocation1 [shape = 'u32[144,128]{1,0:T(1,128)}', space=vmem, size = 0x12000, scoped, tag = 'internal scratch']
  %s0 = inlined_call_operand.vmem [shape: f32[32,16], index: 0, kind: input, shape index: {}]
  %s1 = inlined_call_operand.vmem [shape: bf16[16,24], index: 1, kind: input, shape index: {}]
  %s2 = inlined_call_operand.vmem [shape: f32[1,24], index: 2, kind: input, shape index: {}]
  %s3 = inlined_call_operand.vmem [shape: f32[32,24], index: 3, kind: output, shape index: {}]
  %s4 = sld [smem:[#allocation0]]
  $region22: #{tpu_custom_call.1} parent=0
    _
  %s6 = ssub.s32 1, %s4
  %s7 = scalar_select 0, %s6, %s4
  // Predicated region
  $region2: #{tpu_custom_call.1} parent=0 // pred_check
    _
  $region3: #{tpu_custom_call.1} parent=0 // pred_check_branch
    %9 = sbr.rel (0) target = $region5
  $region4: #{tpu_custom_call.1} parent=0 // pred_region
    _
  $region5: #{tpu_custom_call.1} parent=0 // pred_fallthru
    _
  // Predicated region
  $region6: #{tpu_custom_call.1} parent=0 // pred_check
    _
  $region7: #{tpu_custom_call.1} parent=0 // pred_check_branch
    %11 = sbr.rel (0) target = $region9
  $region8: #{tpu_custom_call.1} parent=0 // pred_region
    _
  $region9: #{tpu_custom_call.1} parent=0 // pred_fallthru
    _
  // Predicated region
  $region10: #{tpu_custom_call.1} parent=0 // pred_check
    _
  $region11: #{tpu_custom_call.1} parent=0 // pred_check_branch
    %13 = sbr.rel (0) target = $region13
  $region12: #{tpu_custom_call.1} parent=0 // pred_region
    _
  $region13: #{tpu_custom_call.1} parent=0 // pred_fallthru
    _
  %v15 = vld [vmem:[%s0] sm:$0xff]
  %v16 = vld [vmem:[%s0 + $0x8] sm:$0xff]
  %v17 = vld [vmem:[%s0 + $0x10] sm:$0xff]
  %v18 = vld [vmem:[%s0 + $0x18] sm:$0xff]
  %v19 = vpack.c.bf16 %v16, %v15
  %v20 = vpack.c.bf16 %v18, %v17
  %v21 = vld [vmem:[%s1] sm:$0xf]
  %v22 = vld [vmem:[%s1 + $0x4] sm:$0xf]
  %v23 = vld [vmem:[%s2] sm:$0x1]
  %v25 = vlaneseq
  %v26 = vshrl.u32 %v25, 7
  %v27 = vsub.s32 0, %v26
  %v28 = vrot.slane %v23, %v27
  %v32 = vunpack.c.l.b16 %v21
  %v33 = vunpack.c.l.b16 %v22
  %v34 = vpack.c.b16 %v33, %v32
  %vm36 = vcmask 130048
  %v38 = vsel %vm36, %v19, 0
  %v41 = vsel %vm36, %v20, 0
  %43 = vmatprep.subr.bf16.mxu0 0
  %44 = vmatpush1.bf16.msra.mxu0 %v34
  %45 = vmatprep.subr.bf16.mxu0 0
  %46 = vmatpush1.bf16.msra.mxu0 0
  %47 = vmatprep.subr.bf16.mxu0 0
  %48 = vmatpush1.bf16.msra.mxu0 0
  %49 = vmatprep.subr.bf16.mxu0 0
  %50 = vmatpush1.bf16.msra.mxu0 0
  %51 = vmatprep.subr.bf16.mxu0 0
  %52 = vmatpush1.bf16.msra.mxu0 0
  %53 = vmatprep.subr.bf16.mxu0 0
  %54 = vmatpush1.bf16.msra.mxu0 0
  %55 = vmatprep.subr.bf16.mxu0 0
  %56 = vmatpush1.bf16.msra.mxu0 0
  %57 = vmatprep.subr.bf16.mxu0 0
  %58 = vmatpush1.bf16.msra.mxu0 0
  %59 = vmatprep.subr.bf16.mxu0 0
  %60 = vmatpush1.bf16.msra.mxu0 0
  %61 = vmatprep.subr.bf16.mxu0 0
  %62 = vmatpush1.bf16.msra.mxu0 0
  %63 = vmatprep.subr.bf16.mxu0 0
  %64 = vmatpush1.bf16.msra.mxu0 0
  %65 = vmatprep.subr.bf16.mxu0 0
  %66 = vmatpush1.bf16.msra.mxu0 0
  %67 = vmatprep.subr.bf16.mxu0 0
  %68 = vmatpush1.bf16.msra.mxu0 0
  %69 = vmatprep.subr.bf16.mxu0 0
  %70 = vmatpush1.bf16.msra.mxu0 0
  %71 = vmatprep.subr.bf16.mxu0 0
  %72 = vmatpush1.bf16.msra.mxu0 0
  %73 = vmatprep.subr.bf16.mxu0 0
  %74 = vmatpush1.bf16.msra.mxu0 0
  %75 = vmatprep.mubr.bf16.mxu0 0
  %76 = vmatmul.mubr.bf16.gmra.mrb[0].mxu0 %v38
  %v77 = vpop.f32.mrb[0].mxu0
  %v78 = vadd.f32 %v28, %v77
  %v79 = vpop.f32.mrb[0].mxu0
  %v80 = vpop.f32.mrb[0].mxu0
  %v81 = vadd.f32 %v28, %v80
  %v82 = vpop.f32.mrb[0].mxu0
  %83 = vmatprep.mubr.bf16.mxu0 0
  %84 = vmatmul.mubr.bf16.gmra.mrb[0].mxu0 %v41
  %v85 = vpop.f32.mrb[0].mxu0
  %v86 = vadd.f32 %v28, %v85
  %v87 = vpop.f32.mrb[0].mxu0
  %v88 = vpop.f32.mrb[0].mxu0
  %v89 = vadd.f32 %v28, %v88
  %v90 = vpop.f32.mrb[0].mxu0
  %91 = vdwg.mxu0
  %vm92 = vcmask 195584
  %93 = vst.msk [vmem:[%s3] sm:$0xff] %vm92, %v78
  %94 = vst.msk [vmem:[%s3 + $0x8] sm:$0xff] %vm92, %v81
  %95 = vst.msk [vmem:[%s3 + $0x10] sm:$0xff] %vm92, %v86
  %96 = vst.msk [vmem:[%s3 + $0x18] sm:$0xff] %vm92, %v89
  // Predicated region
  $region14: #{tpu_custom_call.1} parent=0 // pred_check
    _
  $region15: #{tpu_custom_call.1} parent=0 // pred_check_branch
    %98 = sbr.rel (0) target = $region17
  $region16: #{tpu_custom_call.1} parent=0 // pred_region
    _
  $region17: #{tpu_custom_call.1} parent=0 // pred_fallthru
    _
  // Predicated region
  $region18: #{tpu_custom_call.1} parent=0 // pred_check
    _
  $region19: #{tpu_custom_call.1} parent=0 // pred_check_branch
    %100 = sbr.rel (0) target = $region21
  $region20: #{tpu_custom_call.1} parent=0 // pred_region
    _
  $region21: #{tpu_custom_call.1} parent=0 // pred_fallthru
    _

</llo_original>
